<compile_context>
chip_gen: v5e
topology: v5e:2x2
jax: 0.10.0
libtpu: 0.0.40
codegen_flags: <defaults>
</compile_context>

<pallas_src>
import functools
import math

import jax
import jax.numpy as jnp
from jax.experimental import pallas as pl
from jax.experimental.pallas import tpu as pltpu


def _round_up(v, m):
    return ((v + m - 1) // m) * m


@functools.lru_cache(maxsize=None)
def _vmem_budget_bytes():
    """Generation-aware scoped-VMEM budget (~75% of physical VMEM)."""
    cap = 64 * 1024 * 1024  # conservative default = v7x physical VMEM
    try:
        info = pltpu.get_tpu_info()
        cap = int(getattr(info, "vmem_capacity_bytes", cap))
    except Exception:
        pass
    # 48 MiB on v7x (64 MiB physical); 96 MiB on v5e/v6e (128 MiB physical).
    return int(cap * 3 // 4)


# ----------------------------------------------------------------------------
# Fused, row-tiled GCN kernel: out[i*tm:(i+1)*tm] = adj_tile @ (x @ W)
# x and W are VMEM-resident across the grid; adj row tiles are streamed with
# BlockSpec double-buffering.  `support` never touches HBM.
# ----------------------------------------------------------------------------
def _gcn_rowtile_kernel(x_ref, w_ref, adj_ref, o_ref):
    # support = x @ W, f32 accumulation on the MXU.  Recomputed per row tile
    # (parallel-safe for megacore; hidden under the HBM-bound adj stream).
    support = jnp.dot(x_ref[...], w_ref[...], preferred_element_type=jnp.float32)
    # Keep the second matmul at full MXU rate when inputs are bf16.
    support = support.astype(x_ref.dtype)
    out = jnp.dot(adj_ref[...], support, preferred_element_type=jnp.float32)
    o_ref[...] = out.astype(o_ref.dtype)


def gcn_forward_rowtiled(x, w, adj, *, tm, vmem_limit_bytes):
    n, f_in = x.shape
    f_out = w.shape[1]
    grid_m = pl.cdiv(n, tm)  # ragged last tile handled by masked output writes
    return pl.pallas_call(
        _gcn_rowtile_kernel,
        out_shape=jax.ShapeDtypeStruct((n, f_out), jnp.float32),
        grid_spec=pltpu.PrefetchScalarGridSpec(
            num_scalar_prefetch=0,
            grid=(grid_m,),
            in_specs=[
                pl.BlockSpec((n, f_in), lambda i: (0, 0)),      # x   (resident)
                pl.BlockSpec((f_in, f_out), lambda i: (0, 0)),  # W   (resident)
                pl.BlockSpec((tm, n), lambda i: (i, 0)),        # adj (streamed)
            ],
            out_specs=pl.BlockSpec((tm, f_out), lambda i: (i, 0)),
        ),
        compiler_params=pltpu.CompilerParams(
            dimension_semantics=("parallel",),      # shard rows across TCs (v7x)
            vmem_limit_bytes=vmem_limit_bytes,
        ),
    )(x, w, adj)


def _choose_row_tile(n, f_in, f_out, in_dtype, budget, max_tm=512):
    """Largest legal adjacency row-tile that keeps the working set in VMEM.

    Returns None if x / W / support cannot stay VMEM-resident (fallback path).
    """
    in_bytes = jnp.dtype(in_dtype).itemsize
    # Resident across the whole grid: x, W, and the recomputed f32 support.
    resident = in_bytes * (n * f_in + f_in * f_out) + 4 * n * f_out
    # Streamed per grid step (double-buffered): adj row tile + f32 output tile.
    per_row = 2 * (in_bytes * n + 4 * f_out)
    avail = budget - resident - (4 << 20)  # slack for compiler temporaries
    if avail <= per_row:
        return None
    tm = min(max_tm, avail // per_row)
    if tm >= n:
        return n  # single full-extent row block (always layout-legal)
    tm = (tm // 16) * 16  # sublane-legal for both f32 (8) and bf16 (16)
    return int(tm) if tm >= 16 else None


# ----------------------------------------------------------------------------
# General tiled MXU matmul fallback (only for graphs where x or support do not
# fit in VMEM).  Accumulates directly into the resident f32 output block.
# ----------------------------------------------------------------------------
def _matmul_kernel(a_ref, b_ref, o_ref):
    @pl.when(pl.program_id(2) == 0)
    def _():
        o_ref[...] = jnp.zeros_like(o_ref)

    o_ref[...] += jnp.dot(a_ref[...], b_ref[...], preferred_element_type=jnp.float32)


def pallas_matmul(a, b, *, tm=512, tn=512, tk=512):
    """Tiled MXU matmul (f32 output). Pads operands to tile multiples (zero
    padding does not change the product), so arbitrary M/N/K are correct."""
    M, K = a.shape
    K2, N = b.shape
    assert K == K2
    tm = min(tm, _round_up(M, 8))
    tk = min(tk, _round_up(K, 128))
    tn = min(tn, _round_up(N, 128))
    Mp, Kp, Np = _round_up(M, tm), _round_up(K, tk), _round_up(N, tn)
    a_p = a if (Mp, Kp) == (M, K) else jnp.pad(a, ((0, Mp - M), (0, Kp - K)))
    b_p = b if (Kp, Np) == (K, N) else jnp.pad(b, ((0, Kp - K), (0, Np - N)))

    grid = (Mp // tm, Np // tn, Kp // tk)
    out = pl.pallas_call(
        _matmul_kernel,
        out_shape=jax.ShapeDtypeStruct((Mp, Np), jnp.float32),
        grid_spec=pltpu.PrefetchScalarGridSpec(
            num_scalar_prefetch=0,
            grid=grid,
            in_specs=[
                pl.BlockSpec((tm, tk), lambda i, j, k: (i, k)),
                pl.BlockSpec((tk, tn), lambda i, j, k: (k, j)),
            ],
            out_specs=pl.BlockSpec((tm, tn), lambda i, j, k: (i, j)),
        ),
        compiler_params=pltpu.CompilerParams(
            dimension_semantics=("parallel", "parallel", "arbitrary"),
            vmem_limit_bytes=_vmem_budget_bytes(),
        ),
    )(a_p, b_p)
    return out[:M, :N] if (Mp, Np) != (M, N) else out


class GraphConvolution:
    """JAX/Pallas port of the PyTorch GraphConvolution module (no bias)."""

    def __init__(self, in_features, out_features, key, use_bf16=False):
        # xavier_uniform_: U(-a, a) with a = sqrt(6 / (fan_in + fan_out))
        bound = math.sqrt(6.0 / (in_features + out_features))
        self.weight = jax.random.uniform(
            key, (in_features, out_features), dtype=jnp.float32,
            minval=-bound, maxval=bound,
        )
        self.use_bf16 = use_bf16

    def __call__(self, x, adj):
        w = self.weight
        if self.use_bf16:
            # adj is row-normalized; bf16 halves the dominant N^2 HBM stream and
            # unlocks full-rate MXU.  Accumulation stays f32 inside the kernel.
            x = x.astype(jnp.bfloat16)
            adj = adj.astype(jnp.bfloat16)
            w = w.astype(jnp.bfloat16)

        n, f_in = x.shape
        f_out = w.shape[1]
        budget = _vmem_budget_bytes()
        tm = _choose_row_tile(n, f_in, f_out, x.dtype, budget)
        if tm is not None:
            # Single fused launch; support never leaves VMEM.
            return gcn_forward_rowtiled(x, w, adj, tm=tm, vmem_limit_bytes=budget)

        # Pathological fallback (x or support too large for VMEM residency):
        # two tiled MXU matmuls.  support round-trips HBM here, but its
        # N*F_out bytes are negligible next to the N^2 adj stream.
        # TODO(synk): block-sparse adj tiling via scalar prefetch to skip
        # all-zero adjacency tiles for very large sparse graphs.
        support = pallas_matmul(x, w)
        return pallas_matmul(adj, support)


if __name__ == "__main__":
    key = jax.random.PRNGKey(0)
    k_w, k_x, k_a = jax.random.split(key, 3)

    N = 256        # number of graph nodes
    F_IN = 128     # input feature dim
    F_OUT = 128    # output feature dim (lane-dense output)

    layer = GraphConvolution(F_IN, F_OUT, k_w)

    x = jax.random.normal(k_x, (N, F_IN), dtype=jnp.float32)
    # Dense "adjacency"-like matrix (row-normalized random graph + self loops).
    adj_raw = (jax.random.uniform(k_a, (N, N)) < 0.05).astype(jnp.float32)
    adj_raw = adj_raw + jnp.eye(N, dtype=jnp.float32)
    adj = adj_raw / jnp.sum(adj_raw, axis=1, keepdims=True)

    out = jax.block_until_ready(layer(x, adj))
    ref = adj @ (x @ layer.weight)
    assert out.shape == (N, F_OUT)
    assert jnp.allclose(out, ref, atol=1e-4, rtol=1e-4)

    # Exercise the multi-step / ragged row-tile path (N not a tile multiple).
    n2 = 200
    x2 = jax.random.normal(k_x, (n2, F_IN), dtype=jnp.float32)
    a2 = jax.random.uniform(k_a, (n2, n2), dtype=jnp.float32)
    out2 = jax.block_until_ready(
        gcn_forward_rowtiled(x2, layer.weight, a2, tm=64,
                             vmem_limit_bytes=_vmem_budget_bytes()))
    ref2 = a2 @ (x2 @ layer.weight)
    assert out2.shape == (n2, F_OUT)
    assert jnp.allclose(out2, ref2, atol=1e-3, rtol=1e-3)

    # Optional bf16 operand mode (f32 accumulation): looser tolerance.
    layer_bf16 = GraphConvolution(F_IN, F_OUT, k_w, use_bf16=True)
    out3 = jax.block_until_ready(layer_bf16(x, adj))
    assert jnp.allclose(out3, ref, atol=5e-2, rtol=5e-2)

    # General tiled-matmul fallback on non-multiple-of-tile shapes.
    k_a2, k_b2 = jax.random.split(k_a)
    a3 = jax.random.normal(k_a2, (200, 96), dtype=jnp.float32)
    b3 = jax.random.normal(k_b2, (96, 160), dtype=jnp.float32)
    out4 = jax.block_until_ready(pallas_matmul(a3, b3))
    assert out4.shape == (200, 160)
    assert jnp.allclose(out4, a3 @ b3, atol=1e-3, rtol=1e-3)

    print("KERNEL_OK")
</pallas_src>

<mosaic_0001>
module attributes {stable_mosaic.version = 11 : i64} {
  func.func @_gcn_rowtile_kernel(%arg0: i32, %arg1: memref<256x128xf32, #tpu.memory_space<vmem>>, %arg2: memref<128x128xf32, #tpu.memory_space<vmem>>, %arg3: memref<256x256xf32, #tpu.memory_space<vmem>>, %arg4: memref<256x128xf32, #tpu.memory_space<vmem>>) attributes {dimension_semantics = [#tpu.dimension_semantics<parallel>], iteration_bounds = array<i64: 1>, scalar_prefetch = 0 : i64, scratch_operands = 0 : i64, tpu.core_type = #tpu.core_type<tc>, window_params = [{pipeline_mode = #tpu.pipeline_mode<synchronous>, transform_indices = @transform_0, window_bounds = array<i64: 256, 128>}, {pipeline_mode = #tpu.pipeline_mode<synchronous>, transform_indices = @transform_1, window_bounds = array<i64: 128, 128>}, {transform_indices = @transform_2, window_bounds = array<i64: 256, 256>}, {transform_indices = @transform_3, window_bounds = array<i64: 256, 128>}]} {
    %c0 = arith.constant 0 : index
    %c0_0 = arith.constant 0 : index
    %0 = vector.load %arg1[%c0, %c0_0] : memref<256x128xf32, #tpu.memory_space<vmem>>, vector<256x128xf32>
    %c0_1 = arith.constant 0 : index
    %c0_2 = arith.constant 0 : index
    %1 = vector.load %arg2[%c0_1, %c0_2] : memref<128x128xf32, #tpu.memory_space<vmem>>, vector<128x128xf32>
    %cst = arith.constant dense<0.000000e+00> : vector<256x128xf32>
    %2 = tpu.matmul %0, %1, %cst {dimension_numbers = #tpu.dot_dimension_numbers<[1], [0], [0], [1], [0, 0, 1, 1], [], []>} : vector<256x128xf32>, vector<128x128xf32>, vector<256x128xf32> -> vector<256x128xf32>
    %c0_3 = arith.constant 0 : index
    %c0_4 = arith.constant 0 : index
    %3 = vector.load %arg3[%c0_3, %c0_4] : memref<256x256xf32, #tpu.memory_space<vmem>>, vector<256x256xf32>
    %cst_5 = arith.constant dense<0.000000e+00> : vector<256x128xf32>
    %4 = tpu.matmul %3, %2, %cst_5 {dimension_numbers = #tpu.dot_dimension_numbers<[1], [0], [0], [1], [0, 0, 1, 1], [], []>} : vector<256x256xf32>, vector<256x128xf32>, vector<256x128xf32> -> vector<256x128xf32>
    %c0_6 = arith.constant 0 : index
    %c0_7 = arith.constant 0 : index
    %5 = vector.load %arg4[%c0_6, %c0_7] : memref<256x128xf32, #tpu.memory_space<vmem>>, vector<256x128xf32>
    tpu.vector_store %arg4[%c0_6, %c0_7], %4 {strides = array<i32>} : memref<256x128xf32, #tpu.memory_space<vmem>>, vector<256x128xf32>,
    return
  }
  func.func @transform_0(%arg0: i32) -> (i32, i32) {
    %c0_i32 = arith.constant 0 : i32
    %c0_i32_0 = arith.constant 0 : i32
    %c0_i32_1 = arith.constant 0 : i32
    return %c0_i32, %c0_i32_0 : i32, i32
  }
  func.func @transform_1(%arg0: i32) -> (i32, i32) {
    %c0_i32 = arith.constant 0 : i32
    %c0_i32_0 = arith.constant 0 : i32
    %c0_i32_1 = arith.constant 0 : i32
    return %c0_i32, %c0_i32_0 : i32, i32
  }
  func.func @transform_2(%arg0: i32) -> (i32, i32) {
    %c0_i32 = arith.constant 0 : i32
    %c0_i32_0 = arith.constant 0 : i32
    return %arg0, %c0_i32 : i32, i32
  }
  func.func @transform_3(%arg0: i32) -> (i32, i32) {
    %c0_i32 = arith.constant 0 : i32
    %c0_i32_0 = arith.constant 0 : i32
    return %arg0, %c0_i32 : i32, i32
  }
}

</mosaic_0001>

<llo_original>
// kernel: tpu_custom_call.1
$region0: #{tpu_custom_call.1}
  #allocation0 [shape = 'u32[]', space=smem, size = 0x4, offset = 0x4, fixed_abs, tag = 'smem constant byte address 0x4 - core index']
  #allocation1 [shape = 'u32[72,128]{1,0:T(1,128)}', space=vmem, size = 0x9000, scoped, tag = 'internal scratch']
  %s0 = inlined_call_operand.hbm [shape: f32[256,128], index: 0, kind: input, shape index: {}]
  %s1 = inlined_call_operand.hbm [shape: f32[128,128], index: 1, kind: input, shape index: {}]
  %s2 = inlined_call_operand.hbm [shape: f32[256,256], index: 2, kind: input, shape index: {}]
  %s3 = inlined_call_operand.hbm [shape: f32[256,128], index: 3, kind: output, shape index: {}]
  %s4 = sld [smem:[#allocation0]]
  $region34: #{tpu_custom_call.1} parent=0
    _
  %s6 = ssub.s32 1, %s4
  %s7 = scalar_select 0, %s6, %s4
  $region1: #{tpu_custom_call.1} parent=0
    #allocation2 [shape = 'u8[131072]{0}', space=vmem, size = 0x20000, scoped, tag = 'input window, operand 0, single buffered']
    #allocation3 [shape = 's32[1]{0}', space=sflag, size = 0x4, scoped, tag = 'scoped memory for tpu_custom_call.1']
    #allocation4 [shape = 's32[1]{0}', space=sflag, size = 0x4, scoped, tag = 'scoped memory for tpu_custom_call.1']
    #allocation5 [shape = 'u8[65536]{0}', space=vmem, size = 0x10000, scoped, tag = 'input window, operand 1, single buffered']
    #allocation6 [shape = 's32[1]{0}', space=sflag, size = 0x4, scoped, tag = 'scoped memory for tpu_custom_call.1']
    #allocation7 [shape = 'u8[262144]{0}', space=vmem, size = 0x40000, scoped, tag = 'input window, operand 2, single buffered']
    #allocation8 [shape = 'u8[131072]{0}', space=vmem, size = 0x20000, scoped, tag = 'output window, operand 0, single buffered']
    %8 = vsyncpa [#allocation3], 0
    %9 = vsyncpa [#allocation6], 0
    %10 = vsyncpa [#allocation4], 0
    // Predicated region
    $region2: #{tpu_custom_call.1} parent=1 // pred_check
      _
    $region3: #{tpu_custom_call.1} parent=1 // pred_check_branch
      %12 = sbr.rel (0) target = $region5
    $region4: #{tpu_custom_call.1} parent=1 // pred_region
      %14 = vsyncadd [#allocation3], 0
      %s15 = sshll.u32 %s0, 4
      %s16 = int_to_ptr.hbm [resolvable:$true] %s15
      %s17 = sshll.u32 [#allocation2], 4
      %s18 = int_to_ptr.vmem [resolvable:$true] %s17
      %23 = dma.hbm_to_vmem [thread:$0]  %s16, 4096, %s18, [#allocation3], 128, 128, 8
    $region5: #{tpu_custom_call.1} parent=1 // pred_fallthru
      _
    // Predicated region
    $region6: #{tpu_custom_call.1} parent=1 // pred_check
      _
    $region7: #{tpu_custom_call.1} parent=1 // pred_check_branch
      %25 = sbr.rel (0) target = $region9
    $region8: #{tpu_custom_call.1} parent=1 // pred_region
      %27 = vsyncadd [#allocation6], 0
      %s28 = sshll.u32 %s1, 4
      %s29 = int_to_ptr.hbm [resolvable:$true] %s28
      %s30 = sshll.u32 [#allocation5], 4
      %s31 = int_to_ptr.vmem [resolvable:$true] %s30
      %36 = dma.hbm_to_vmem [thread:$0]  %s29, 2048, %s31, [#allocation6], 128, 128, 8
    $region9: #{tpu_custom_call.1} parent=1 // pred_fallthru
      _
    // Predicated region
    $region10: #{tpu_custom_call.1} parent=1 // pred_check
      _
    $region11: #{tpu_custom_call.1} parent=1 // pred_check_branch
      %38 = sbr.rel (0) target = $region13
    $region12: #{tpu_custom_call.1} parent=1 // pred_region
      %40 = vsyncadd [#allocation6], 0
      %s41 = sshll.u32 %s2, 4
      %s42 = int_to_ptr.hbm [resolvable:$true] %s41
      %s43 = sshll.u32 [#allocation7], 4
      %s44 = int_to_ptr.vmem [resolvable:$true] %s43
      %49 = dma.hbm_to_vmem [thread:$0]  %s42, 8192, %s44, [#allocation6], 256, 256, 16
    $region13: #{tpu_custom_call.1} parent=1 // pred_fallthru
      _
    // Predicated region
    $region14: #{tpu_custom_call.1} parent=1 // pred_check
      _
    $region15: #{tpu_custom_call.1} parent=1 // pred_check_branch
      %51 = sbr.rel (0) target = $region17
    $region16: #{tpu_custom_call.1} parent=1 // pred_region
      %53 = dma.done [#allocation3], 4096
    $region17: #{tpu_custom_call.1} parent=1 // pred_fallthru
      _
    // Predicated region
    $region18: #{tpu_custom_call.1} parent=1 // pred_check
      _
    $region19: #{tpu_custom_call.1} parent=1 // pred_check_branch
      %55 = sbr.rel (0) target = $region21
    $region20: #{tpu_custom_call.1} parent=1 // pred_region
      %57 = dma.done [#allocation6], 2048
    $region21: #{tpu_custom_call.1} parent=1 // pred_fallthru
      _
    // Predicated region
    $region22: #{tpu_custom_call.1} parent=1 // pred_check
      _
    $region23: #{tpu_custom_call.1} parent=1 // pred_check_branch
      %59 = sbr.rel (0) target = $region25
    $region24: #{tpu_custom_call.1} parent=1 // pred_region
      %61 = dma.done [#allocation6], 8192
    $region25: #{tpu_custom_call.1} parent=1 // pred_fallthru
      _
    %v62 = vld [vmem:[#allocation2] sm:$0xff]
    %v63 = vld [vmem:[#allocation2 + $0x8] sm:$0xff]
    %v64 = vld [vmem:[#allocation2 + $0x10] sm:$0xff]
    %v65 = vld [vmem:[#allocation2 + $0x18] sm:$0xff]
    %v66 = vld [vmem:[#allocation2 + $0x20] sm:$0xff]
    %v67 = vld [vmem:[#allocation2 + $0x28] sm:$0xff]
    %v68 = vld [vmem:[#allocation2 + $0x30] sm:$0xff]
    %v69 = vld [vmem:[#allocation2 + $0x38] sm:$0xff]
    %v70 = vld [vmem:[#allocation2 + $0x40] sm:$0xff]
    %v71 = vld [vmem:[#allocation2 + $0x48] sm:$0xff]
    %v72 = vld [vmem:[#allocation2 + $0x50] sm:$0xff]
    %v73 = vld [vmem:[#allocation2 + $0x58] sm:$0xff]
    %v74 = vld [vmem:[#allocation2 + $0x60] sm:$0xff]
    %v75 = vld [vmem:[#allocation2 + $0x68] sm:$0xff]
    %v76 = vld [vmem:[#allocation2 + $0x70] sm:$0xff]
    %v77 = vld [vmem:[#allocation2 + $0x78] sm:$0xff]
    %v78 = vld [vmem:[#allocation2 + $0x80] sm:$0xff]
    %v79 = vld [vmem:[#allocation2 + $0x88] sm:$0xff]
    %v80 = vld [vmem:[#allocation2 + $0x90] sm:$0xff]
    %v81 = vld [vmem:[#allocation2 + $0x98] sm:$0xff]
    %v82 = vld [vmem:[#allocation2 + $0xa0] sm:$0xff]
    %v83 = vld [vmem:[#allocation2 + $0xa8] sm:$0xff]
    %v84 = vld [vmem:[#allocation2 + $0xb0] sm:$0xff]
    %v85 = vld [vmem:[#allocation2 + $0xb8] sm:$0xff]
    %v86 = vld [vmem:[#allocation2 + $0xc0] sm:$0xff]
    %v87 = vld [vmem:[#allocation2 + $0xc8] sm:$0xff]
    %v88 = vld [vmem:[#allocation2 + $0xd0] sm:$0xff]
    %v89 = vld [vmem:[#allocation2 + $0xd8] sm:$0xff]
    %v90 = vld [vmem:[#allocation2 + $0xe0] sm:$0xff]
    %v91 = vld [vmem:[#allocation2 + $0xe8] sm:$0xff]
    %v92 = vld [vmem:[#allocation2 + $0xf0] sm:$0xff]
    %v93 = vld [vmem:[#allocation2 + $0xf8] sm:$0xff]
    %v94 = vld [vmem:[#allocation5] sm:$0xff]
    %v95 = vld [vmem:[#allocation5 + $0x8] sm:$0xff]
    %v96 = vld [vmem:[#allocation5 + $0x10] sm:$0xff]
    %v97 = vld [vmem:[#allocation5 + $0x18] sm:$0xff]
    %v98 = vld [vmem:[#allocation5 + $0x20] sm:$0xff]
    %v99 = vld [vmem:[#allocation5 + $0x28] sm:$0xff]
    %v100 = vld [vmem:[#allocation5 + $0x30] sm:$0xff]
    %v101 = vld [vmem:[#allocation5 + $0x38] sm:$0xff]
    %v102 = vld [vmem:[#allocation5 + $0x40] sm:$0xff]
    %v103 = vld [vmem:[#allocation5 + $0x48] sm:$0xff]
    %v104 = vld [vmem:[#allocation5 + $0x50] sm:$0xff]
    %v105 = vld [vmem:[#allocation5 + $0x58] sm:$0xff]
    %v106 = vld [vmem:[#allocation5 + $0x60] sm:$0xff]
    %v107 = vld [vmem:[#allocation5 + $0x68] sm:$0xff]
    %v108 = vld [vmem:[#allocation5 + $0x70] sm:$0xff]
    %v109 = vld [vmem:[#allocation5 + $0x78] sm:$0xff]
    %110 = vmatpush.msra.mxu0 %v109
    %111 = vmatpush.msra.mxu0 %v108
    %112 = vmatpush.msra.mxu0 %v107
    %113 = vmatpush.msra.mxu0 %v106
    %114 = vmatpush.msra.mxu0 %v105
    %115 = vmatpush.msra.mxu0 %v104
    %116 = vmatpush.msra.mxu0 %v103
    %117 = vmatpush.msra.mxu0 %v102
    %118 = vmatpush.msra.mxu0 %v101
    %119 = vmatpush.msra.mxu0 %v100
    %120 = vmatpush.msra.mxu0 %v99
    %121 = vmatpush.msra.mxu0 %v98
    %122 = vmatpush.msra.mxu0 %v97
    %123 = vmatpush.msra.mxu0 %v96
    %124 = vmatpush.msra.mxu0 %v95
    %125 = vmatpush.msra.mxu0 %v94
    %126 = vmatmul.f32.gmra.mxu0 %v62
    %v127 = vpop.f32.mrf.mxu0
    %v128 = vadd.f32 0.0, %v127
    %129 = vmatmul.f32.gmra.mxu0 %v63
    %v130 = vpop.f32.mrf.mxu0
    %v131 = vadd.f32 0.0, %v130
    %132 = vmatmul.f32.gmra.mxu0 %v64
    %v133 = vpop.f32.mrf.mxu0
    %v134 = vadd.f32 0.0, %v133
    %135 = vmatmul.f32.gmra.mxu0 %v65
    %v136 = vpop.f32.mrf.mxu0
    %v137 = vadd.f32 0.0, %v136
    %138 = vmatmul.f32.gmra.mxu0 %v66
    %v139 = vpop.f32.mrf.mxu0
    %v140 = vadd.f32 0.0, %v139
    %141 = vmatmul.f32.gmra.mxu0 %v67
    %v142 = vpop.f32.mrf.mxu0
    %v143 = vadd.f32 0.0, %v142
    %144 = vmatmul.f32.gmra.mxu0 %v68
    %v145 = vpop.f32.mrf.mxu0
    %v146 = vadd.f32 0.0, %v145
    %147 = vmatmul.f32.gmra.mxu0 %v69
    %v148 = vpop.f32.mrf.mxu0
    %v149 = vadd.f32 0.0, %v148
    %150 = vmatmul.f32.gmra.mxu0 %v70
    %v151 = vpop.f32.mrf.mxu0
    %v152 = vadd.f32 0.0, %v151
    %153 = vmatmul.f32.gmra.mxu0 %v71
    %v154 = vpop.f32.mrf.mxu0
    %v155 = vadd.f32 0.0, %v154
    %156 = vmatmul.f32.gmra.mxu0 %v72
    %v157 = vpop.f32.mrf.mxu0
    %v158 = vadd.f32 0.0, %v157
    %159 = vmatmul.f32.gmra.mxu0 %v73
    %v160 = vpop.f32.mrf.mxu0
    %v161 = vadd.f32 0.0, %v160
    %162 = vmatmul.f32.gmra.mxu0 %v74
    %v163 = vpop.f32.mrf.mxu0
    %v164 = vadd.f32 0.0, %v163
    %165 = vmatmul.f32.gmra.mxu0 %v75
    %v166 = vpop.f32.mrf.mxu0
    %v167 = vadd.f32 0.0, %v166
    %168 = vmatmul.f32.gmra.mxu0 %v76
    %v169 = vpop.f32.mrf.mxu0
    %v170 = vadd.f32 0.0, %v169
    %171 = vmatmul.f32.gmra.mxu0 %v77
    %v172 = vpop.f32.mrf.mxu0
    %v173 = vadd.f32 0.0, %v172
    %174 = vmatmul.f32.gmra.mxu0 %v78
    %v175 = vpop.f32.mrf.mxu0
    %v176 = vadd.f32 0.0, %v175
    %177 = vmatmul.f32.gmra.mxu0 %v79
    %v178 = vpop.f32.mrf.mxu0
    %v179 = vadd.f32 0.0, %v178
    %180 = vmatmul.f32.gmra.mxu0 %v80
    %v181 = vpop.f32.mrf.mxu0
    %v182 = vadd.f32 0.0, %v181
    %183 = vmatmul.f32.gmra.mxu0 %v81
    %v184 = vpop.f32.mrf.mxu0
    %v185 = vadd.f32 0.0, %v184
    %186 = vmatmul.f32.gmra.mxu0 %v82
    %v187 = vpop.f32.mrf.mxu0
    %v188 = vadd.f32 0.0, %v187
    %189 = vmatmul.f32.gmra.mxu0 %v83
    %v190 = vpop.f32.mrf.mxu0
    %v191 = vadd.f32 0.0, %v190
    %192 = vmatmul.f32.gmra.mxu0 %v84
    %v193 = vpop.f32.mrf.mxu0
    %v194 = vadd.f32 0.0, %v193
    %195 = vmatmul.f32.gmra.mxu0 %v85
    %v196 = vpop.f32.mrf.mxu0
    %v197 = vadd.f32 0.0, %v196
    %198 = vmatmul.f32.gmra.mxu0 %v86
    %v199 = vpop.f32.mrf.mxu0
    %v200 = vadd.f32 0.0, %v199
    %201 = vmatmul.f32.gmra.mxu0 %v87
    %v202 = vpop.f32.mrf.mxu0
    %v203 = vadd.f32 0.0, %v202
    %204 = vmatmul.f32.gmra.mxu0 %v88
    %v205 = vpop.f32.mrf.mxu0
    %v206 = vadd.f32 0.0, %v205
    %207 = vmatmul.f32.gmra.mxu0 %v89
    %v208 = vpop.f32.mrf.mxu0
    %v209 = vadd.f32 0.0, %v208
    %210 = vmatmul.f32.gmra.mxu0 %v90
    %v211 = vpop.f32.mrf.mxu0
    %v212 = vadd.f32 0.0, %v211
    %213 = vmatmul.f32.gmra.mxu0 %v91
    %v214 = vpop.f32.mrf.mxu0
    %v215 = vadd.f32 0.0, %v214
    %216 = vmatmul.f32.gmra.mxu0 %v92
    %v217 = vpop.f32.mrf.mxu0
    %v218 = vadd.f32 0.0, %v217
    %219 = vmatmul.f32.gmra.mxu0 %v93
    %v220 = vpop.f32.mrf.mxu0
    %v221 = vadd.f32 0.0, %v220
    %222 = vdwg.mxu0
    %v223 = vld [vmem:[#allocation7] sm:$0xff]
    %v224 = vld [vmem:[#allocation7 + $0x8] sm:$0xff]
    %v225 = vld [vmem:[#allocation7 + $0x10] sm:$0xff]
    %v226 = vld [vmem:[#allocation7 + $0x18] sm:$0xff]
    %v227 = vld [vmem:[#allocation7 + $0x20] sm:$0xff]
    %v228 = vld [vmem:[#allocation7 + $0x28] sm:$0xff]
    %v229 = vld [vmem:[#allocation7 + $0x30] sm:$0xff]
    %v230 = vld [vmem:[#allocation7 + $0x38] sm:$0xff]
    %v231 = vld [vmem:[#allocation7 + $0x40] sm:$0xff]
    %v232 = vld [vmem:[#allocation7 + $0x48] sm:$0xff]
    %v233 = vld [vmem:[#allocation7 + $0x50] sm:$0xff]
    %v234 = vld [vmem:[#allocation7 + $0x58] sm:$0xff]
    %v235 = vld [vmem:[#allocation7 + $0x60] sm:$0xff]
    %v236 = vld [vmem:[#allocation7 + $0x68] sm:$0xff]
    %v237 = vld [vmem:[#allocation7 + $0x70] sm:$0xff]
    %v238 = vld [vmem:[#allocation7 + $0x78] sm:$0xff]
    %v239 = vld [vmem:[#allocation7 + $0x80] sm:$0xff]
    %v240 = vld [vmem:[#allocation7 + $0x88] sm:$0xff]
    %v241 = vld [vmem:[#allocation7 + $0x90] sm:$0xff]
    %v242 = vld [vmem:[#allocation7 + $0x98] sm:$0xff]
    %v243 = vld [vmem:[#allocation7 + $0xa0] sm:$0xff]
    %v244 = vld [vmem:[#allocation7 + $0xa8] sm:$0xff]
    %v245 = vld [vmem:[#allocation7 + $0xb0] sm:$0xff]
    %v246 = vld [vmem:[#allocation7 + $0xb8] sm:$0xff]
    %v247 = vld [vmem:[#allocation7 + $0xc0] sm:$0xff]
    %v248 = vld [vmem:[#allocation7 + $0xc8] sm:$0xff]
    %v249 = vld [vmem:[#allocation7 + $0xd0] sm:$0xff]
    %v250 = vld [vmem:[#allocation7 + $0xd8] sm:$0xff]
    %v251 = vld [vmem:[#allocation7 + $0xe0] sm:$0xff]
    %v252 = vld [vmem:[#allocation7 + $0xe8] sm:$0xff]
    %v253 = vld [vmem:[#allocation7 + $0xf0] sm:$0xff]
    %v254 = vld [vmem:[#allocation7 + $0xf8] sm:$0xff]
    %v255 = vld [vmem:[#allocation7 + $0x100] sm:$0xff]
    %v256 = vld [vmem:[#allocation7 + $0x108] sm:$0xff]
    %v257 = vld [vmem:[#allocation7 + $0x110] sm:$0xff]
    %v258 = vld [vmem:[#allocation7 + $0x118] sm:$0xff]
    %v259 = vld [vmem:[#allocation7 + $0x120] sm:$0xff]
    %v260 = vld [vmem:[#allocation7 + $0x128] sm:$0xff]
    %v261 = vld [vmem:[#allocation7 + $0x130] sm:$0xff]
    %v262 = vld [vmem:[#allocation7 + $0x138] sm:$0xff]
    %v263 = vld [vmem:[#allocation7 + $0x140] sm:$0xff]
    %v264 = vld [vmem:[#allocation7 + $0x148] sm:$0xff]
    %v265 = vld [vmem:[#allocation7 + $0x150] sm:$0xff]
    %v266 = vld [vmem:[#allocation7 + $0x158] sm:$0xff]
    %v267 = vld [vmem:[#allocation7 + $0x160] sm:$0xff]
    %v268 = vld [vmem:[#allocation7 + $0x168] sm:$0xff]
    %v269 = vld [vmem:[#allocation7 + $0x170] sm:$0xff]
    %v270 = vld [vmem:[#allocation7 + $0x178] sm:$0xff]
    %v271 = vld [vmem:[#allocation7 + $0x180] sm:$0xff]
    %v272 = vld [vmem:[#allocation7 + $0x188] sm:$0xff]
    %v273 = vld [vmem:[#allocation7 + $0x190] sm:$0xff]
    %v274 = vld [vmem:[#allocation7 + $0x198] sm:$0xff]
    %v275 = vld [vmem:[#allocation7 + $0x1a0] sm:$0xff]
    %v276 = vld [vmem:[#allocation7 + $0x1a8] sm:$0xff]
    %v277 = vld [vmem:[#allocation7 + $0x1b0] sm:$0xff]
    %v278 = vld [vmem:[#allocation7 + $0x1b8] sm:$0xff]
    %v279 = vld [vmem:[#allocation7 + $0x1c0] sm:$0xff]
    %v280 = vld [vmem:[#allocation7 + $0x1c8] sm:$0xff]
    %v281 = vld [vmem:[#allocation7 + $0x1d0] sm:$0xff]
    %v282 = vld [vmem:[#allocation7 + $0x1d8] sm:$0xff]
    %v283 = vld [vmem:[#allocation7 + $0x1e0] sm:$0xff]
    %v284 = vld [vmem:[#allocation7 + $0x1e8] sm:$0xff]
    %v285 = vld [vmem:[#allocation7 + $0x1f0] sm:$0xff]
    %v286 = vld [vmem:[#allocation7 + $0x1f8] sm:$0xff]
    %287 = vmatpush.msra.mxu0 %v173
    %288 = vmatpush.msra.mxu0 %v170
    %289 = vmatpush.msra.mxu0 %v167
    %290 = vmatpush.msra.mxu0 %v164
    %291 = vmatpush.msra.mxu0 %v161
    %292 = vmatpush.msra.mxu0 %v158
    %293 = vmatpush.msra.mxu0 %v155
    %294 = vmatpush.msra.mxu0 %v152
    %295 = vmatpush.msra.mxu0 %v149
    %296 = vmatpush.msra.mxu0 %v146
    %297 = vmatpush.msra.mxu0 %v143
    %298 = vmatpush.msra.mxu0 %v140
    %299 = vmatpush.msra.mxu0 %v137
    %300 = vmatpush.msra.mxu0 %v134
    %301 = vmatpush.msra.mxu0 %v131
    %302 = vmatpush.msra.mxu0 %v128
    %303 = vmatmul.f32.gmra.mxu0 %v223
    %v304 = vpop.f32.mrf.mxu0
    %v305 = vadd.f32 0.0, %v304
    %306 = vmatmul.f32.gmra.mxu0 %v225
    %v307 = vpop.f32.mrf.mxu0
    %v308 = vadd.f32 0.0, %v307
    %309 = vmatmul.f32.gmra.mxu0 %v227
    %v310 = vpop.f32.mrf.mxu0
    %v311 = vadd.f32 0.0, %v310
    %312 = vmatmul.f32.gmra.mxu0 %v229
    %v313 = vpop.f32.mrf.mxu0
    %v314 = vadd.f32 0.0, %v313
    %315 = vmatmul.f32.gmra.mxu0 %v231
    %v316 = vpop.f32.mrf.mxu0
    %v317 = vadd.f32 0.0, %v316
    %318 = vmatmul.f32.gmra.mxu0 %v233
    %v319 = vpop.f32.mrf.mxu0
    %v320 = vadd.f32 0.0, %v319
    %321 = vmatmul.f32.gmra.mxu0 %v235
    %v322 = vpop.f32.mrf.mxu0
    %v323 = vadd.f32 0.0, %v322
    %324 = vmatmul.f32.gmra.mxu0 %v237
    %v325 = vpop.f32.mrf.mxu0
    %v326 = vadd.f32 0.0, %v325
    %327 = vmatmul.f32.gmra.mxu0 %v239
    %v328 = vpop.f32.mrf.mxu0
    %v329 = vadd.f32 0.0, %v328
    %330 = vmatmul.f32.gmra.mxu0 %v241
    %v331 = vpop.f32.mrf.mxu0
    %v332 = vadd.f32 0.0, %v331
    %333 = vmatmul.f32.gmra.mxu0 %v243
    %v334 = vpop.f32.mrf.mxu0
    %v335 = vadd.f32 0.0, %v334
    %336 = vmatmul.f32.gmra.mxu0 %v245
    %v337 = vpop.f32.mrf.mxu0
    %v338 = vadd.f32 0.0, %v337
    %339 = vmatmul.f32.gmra.mxu0 %v247
    %v340 = vpop.f32.mrf.mxu0
    %v341 = vadd.f32 0.0, %v340
    %342 = vmatmul.f32.gmra.mxu0 %v249
    %v343 = vpop.f32.mrf.mxu0
    %v344 = vadd.f32 0.0, %v343
    %345 = vmatmul.f32.gmra.mxu0 %v251
    %v346 = vpop.f32.mrf.mxu0
    %v347 = vadd.f32 0.0, %v346
    %348 = vmatmul.f32.gmra.mxu0 %v253
    %v349 = vpop.f32.mrf.mxu0
    %v350 = vadd.f32 0.0, %v349
    %351 = vmatmul.f32.gmra.mxu0 %v255
    %v352 = vpop.f32.mrf.mxu0
    %v353 = vadd.f32 0.0, %v352
    %354 = vmatmul.f32.gmra.mxu0 %v257
    %v355 = vpop.f32.mrf.mxu0
    %v356 = vadd.f32 0.0, %v355
    %357 = vmatmul.f32.gmra.mxu0 %v259
    %v358 = vpop.f32.mrf.mxu0
    %v359 = vadd.f32 0.0, %v358
    %360 = vmatmul.f32.gmra.mxu0 %v261
    %v361 = vpop.f32.mrf.mxu0
    %v362 = vadd.f32 0.0, %v361
    %363 = vmatmul.f32.gmra.mxu0 %v263
    %v364 = vpop.f32.mrf.mxu0
    %v365 = vadd.f32 0.0, %v364
    %366 = vmatmul.f32.gmra.mxu0 %v265
    %v367 = vpop.f32.mrf.mxu0
    %v368 = vadd.f32 0.0, %v367
    %369 = vmatmul.f32.gmra.mxu0 %v267
    %v370 = vpop.f32.mrf.mxu0
    %v371 = vadd.f32 0.0, %v370
    %372 = vmatmul.f32.gmra.mxu0 %v269
    %v373 = vpop.f32.mrf.mxu0
    %v374 = vadd.f32 0.0, %v373
    %375 = vmatmul.f32.gmra.mxu0 %v271
    %v376 = vpop.f32.mrf.mxu0
    %v377 = vadd.f32 0.0, %v376
    %378 = vmatmul.f32.gmra.mxu0 %v273
    %v379 = vpop.f32.mrf.mxu0
    %v380 = vadd.f32 0.0, %v379
    %381 = vmatmul.f32.gmra.mxu0 %v275
    %v382 = vpop.f32.mrf.mxu0
    %v383 = vadd.f32 0.0, %v382
    %384 = vmatmul.f32.gmra.mxu0 %v277
    %v385 = vpop.f32.mrf.mxu0
    %v386 = vadd.f32 0.0, %v385
    %387 = vmatmul.f32.gmra.mxu0 %v279
    %v388 = vpop.f32.mrf.mxu0
    %v389 = vadd.f32 0.0, %v388
    %390 = vmatmul.f32.gmra.mxu0 %v281
    %v391 = vpop.f32.mrf.mxu0
    %v392 = vadd.f32 0.0, %v391
    %393 = vmatmul.f32.gmra.mxu0 %v283
    %v394 = vpop.f32.mrf.mxu0
    %v395 = vadd.f32 0.0, %v394
    %396 = vmatmul.f32.gmra.mxu0 %v285
    %v397 = vpop.f32.mrf.mxu0
    %v398 = vadd.f32 0.0, %v397
    %399 = vdwg.mxu0
    %400 = vmatpush.msra.mxu0 %v221
    %401 = vmatpush.msra.mxu0 %v218
    %402 = vmatpush.msra.mxu0 %v215
    %403 = vmatpush.msra.mxu0 %v212
    %404 = vmatpush.msra.mxu0 %v209
    %405 = vmatpush.msra.mxu0 %v206
    %406 = vmatpush.msra.mxu0 %v203
    %407 = vmatpush.msra.mxu0 %v200
    %408 = vmatpush.msra.mxu0 %v197
    %409 = vmatpush.msra.mxu0 %v194
    %410 = vmatpush.msra.mxu0 %v191
    %411 = vmatpush.msra.mxu0 %v188
    %412 = vmatpush.msra.mxu0 %v185
    %413 = vmatpush.msra.mxu0 %v182
    %414 = vmatpush.msra.mxu0 %v179
    %415 = vmatpush.msra.mxu0 %v176
    %416 = vmatmul.f32.gmra.mxu0 %v224
    %v417 = vpop.f32.mrf.mxu0
    %v418 = vadd.f32 %v305, %v417
    %419 = vmatmul.f32.gmra.mxu0 %v226
    %v420 = vpop.f32.mrf.mxu0
    %v421 = vadd.f32 %v308, %v420
    %422 = vmatmul.f32.gmra.mxu0 %v228
    %v423 = vpop.f32.mrf.mxu0
    %v424 = vadd.f32 %v311, %v423
    %425 = vmatmul.f32.gmra.mxu0 %v230
    %v426 = vpop.f32.mrf.mxu0
    %v427 = vadd.f32 %v314, %v426
    %428 = vmatmul.f32.gmra.mxu0 %v232
    %v429 = vpop.f32.mrf.mxu0
    %v430 = vadd.f32 %v317, %v429
    %431 = vmatmul.f32.gmra.mxu0 %v234
    %v432 = vpop.f32.mrf.mxu0
    %v433 = vadd.f32 %v320, %v432
    %434 = vmatmul.f32.gmra.mxu0 %v236
    %v435 = vpop.f32.mrf.mxu0
    %v436 = vadd.f32 %v323, %v435
    %437 = vmatmul.f32.gmra.mxu0 %v238
    %v438 = vpop.f32.mrf.mxu0
    %v439 = vadd.f32 %v326, %v438
    %440 = vmatmul.f32.gmra.mxu0 %v240
    %v441 = vpop.f32.mrf.mxu0
    %v442 = vadd.f32 %v329, %v441
    %443 = vmatmul.f32.gmra.mxu0 %v242
    %v444 = vpop.f32.mrf.mxu0
    %v445 = vadd.f32 %v332, %v444
    %446 = vmatmul.f32.gmra.mxu0 %v244
    %v447 = vpop.f32.mrf.mxu0
    %v448 = vadd.f32 %v335, %v447
    %449 = vmatmul.f32.gmra.mxu0 %v246
    %v450 = vpop.f32.mrf.mxu0
    %v451 = vadd.f32 %v338, %v450
    %452 = vmatmul.f32.gmra.mxu0 %v248
    %v453 = vpop.f32.mrf.mxu0
    %v454 = vadd.f32 %v341, %v453
    %455 = vmatmul.f32.gmra.mxu0 %v250
    %v456 = vpop.f32.mrf.mxu0
    %v457 = vadd.f32 %v344, %v456
    %458 = vmatmul.f32.gmra.mxu0 %v252
    %v459 = vpop.f32.mrf.mxu0
    %v460 = vadd.f32 %v347, %v459
    %461 = vmatmul.f32.gmra.mxu0 %v254
    %v462 = vpop.f32.mrf.mxu0
    %v463 = vadd.f32 %v350, %v462
    %464 = vmatmul.f32.gmra.mxu0 %v256
    %v465 = vpop.f32.mrf.mxu0
    %v466 = vadd.f32 %v353, %v465
    %467 = vmatmul.f32.gmra.mxu0 %v258
    %v468 = vpop.f32.mrf.mxu0
    %v469 = vadd.f32 %v356, %v468
    %470 = vmatmul.f32.gmra.mxu0 %v260
    %v471 = vpop.f32.mrf.mxu0
    %v472 = vadd.f32 %v359, %v471
    %473 = vmatmul.f32.gmra.mxu0 %v262
    %v474 = vpop.f32.mrf.mxu0
    %v475 = vadd.f32 %v362, %v474
    %476 = vmatmul.f32.gmra.mxu0 %v264
    %v477 = vpop.f32.mrf.mxu0
    %v478 = vadd.f32 %v365, %v477
    %479 = vmatmul.f32.gmra.mxu0 %v266
    %v480 = vpop.f32.mrf.mxu0
    %v481 = vadd.f32 %v368, %v480
    %482 = vmatmul.f32.gmra.mxu0 %v268
    %v483 = vpop.f32.mrf.mxu0
    %v484 = vadd.f32 %v371, %v483
    %485 = vmatmul.f32.gmra.mxu0 %v270
    %v486 = vpop.f32.mrf.mxu0
    %v487 = vadd.f32 %v374, %v486
    %488 = vmatmul.f32.gmra.mxu0 %v272
    %v489 = vpop.f32.mrf.mxu0
    %v490 = vadd.f32 %v377, %v489
    %491 = vmatmul.f32.gmra.mxu0 %v274
    %v492 = vpop.f32.mrf.mxu0
    %v493 = vadd.f32 %v380, %v492
    %494 = vmatmul.f32.gmra.mxu0 %v276
    %v495 = vpop.f32.mrf.mxu0
    %v496 = vadd.f32 %v383, %v495
    %497 = vmatmul.f32.gmra.mxu0 %v278
    %v498 = vpop.f32.mrf.mxu0
    %v499 = vadd.f32 %v386, %v498
    %500 = vmatmul.f32.gmra.mxu0 %v280
    %v501 = vpop.f32.mrf.mxu0
    %v502 = vadd.f32 %v389, %v501
    %503 = vmatmul.f32.gmra.mxu0 %v282
    %v504 = vpop.f32.mrf.mxu0
    %v505 = vadd.f32 %v392, %v504
    %506 = vmatmul.f32.gmra.mxu0 %v284
    %v507 = vpop.f32.mrf.mxu0
    %v508 = vadd.f32 %v395, %v507
    %509 = vmatmul.f32.gmra.mxu0 %v286
    %v510 = vpop.f32.mrf.mxu0
    %v511 = vadd.f32 %v398, %v510
    %512 = vdwg.mxu0
    %513 = vst [vmem:[#allocation8] sm:$0xff] %v418
    %514 = vst [vmem:[#allocation8 + $0x8] sm:$0xff] %v421
    %515 = vst [vmem:[#allocation8 + $0x10] sm:$0xff] %v424
    %516 = vst [vmem:[#allocation8 + $0x18] sm:$0xff] %v427
    %517 = vst [vmem:[#allocation8 + $0x20] sm:$0xff] %v430
    %518 = vst [vmem:[#allocation8 + $0x28] sm:$0xff] %v433
    %519 = vst [vmem:[#allocation8 + $0x30] sm:$0xff] %v436
    %520 = vst [vmem:[#allocation8 + $0x38] sm:$0xff] %v439
    %521 = vst [vmem:[#allocation8 + $0x40] sm:$0xff] %v442
    %522 = vst [vmem:[#allocation8 + $0x48] sm:$0xff] %v445
    %523 = vst [vmem:[#allocation8 + $0x50] sm:$0xff] %v448
    %524 = vst [vmem:[#allocation8 + $0x58] sm:$0xff] %v451
    %525 = vst [vmem:[#allocation8 + $0x60] sm:$0xff] %v454
    %526 = vst [vmem:[#allocation8 + $0x68] sm:$0xff] %v457
    %527 = vst [vmem:[#allocation8 + $0x70] sm:$0xff] %v460
    %528 = vst [vmem:[#allocation8 + $0x78] sm:$0xff] %v463
    %529 = vst [vmem:[#allocation8 + $0x80] sm:$0xff] %v466
    %530 = vst [vmem:[#allocation8 + $0x88] sm:$0xff] %v469
    %531 = vst [vmem:[#allocation8 + $0x90] sm:$0xff] %v472
    %532 = vst [vmem:[#allocation8 + $0x98] sm:$0xff] %v475
    %533 = vst [vmem:[#allocation8 + $0xa0] sm:$0xff] %v478
    %534 = vst [vmem:[#allocation8 + $0xa8] sm:$0xff] %v481
    %535 = vst [vmem:[#allocation8 + $0xb0] sm:$0xff] %v484
    %536 = vst [vmem:[#allocation8 + $0xb8] sm:$0xff] %v487
    %537 = vst [vmem:[#allocation8 + $0xc0] sm:$0xff] %v490
    %538 = vst [vmem:[#allocation8 + $0xc8] sm:$0xff] %v493
    %539 = vst [vmem:[#allocation8 + $0xd0] sm:$0xff] %v496
    %540 = vst [vmem:[#allocation8 + $0xd8] sm:$0xff] %v499
    %541 = vst [vmem:[#allocation8 + $0xe0] sm:$0xff] %v502
    %542 = vst [vmem:[#allocation8 + $0xe8] sm:$0xff] %v505
    %543 = vst [vmem:[#allocation8 + $0xf0] sm:$0xff] %v508
    %544 = vst [vmem:[#allocation8 + $0xf8] sm:$0xff] %v511
    // Predicated region
    $region26: #{tpu_custom_call.1} parent=1 // pred_check
      _
    $region27: #{tpu_custom_call.1} parent=1 // pred_check_branch
      %546 = sbr.rel (0) target = $region29
    $region28: #{tpu_custom_call.1} parent=1 // pred_region
      %548 = vsyncadd [#allocation4], 0
      %s549 = sshll.u32 [#allocation8], 4
      %s550 = int_to_ptr.vmem [resolvable:$true] %s549
      %s551 = sshll.u32 %s3, 4
      %s552 = int_to_ptr.hbm [resolvable:$true] %s551
      %557 = dma.vmem_to_hbm [thread:$0]  %s550, 4096, %s552, [#allocation4], 128, 128, 8
    $region29: #{tpu_custom_call.1} parent=1 // pred_fallthru
      _
    // Predicated region
    $region30: #{tpu_custom_call.1} parent=1 // pred_check
      _
    $region31: #{tpu_custom_call.1} parent=1 // pred_check_branch
      %559 = sbr.rel (0) target = $region33
    $region32: #{tpu_custom_call.1} parent=1 // pred_region
      %561 = dma.done [#allocation4], 4096
    $region33: #{tpu_custom_call.1} parent=1 // pred_fallthru
      _
    %562 = vsyncpa [#allocation3], 1
    %563 = vsyncpa [#allocation6], 1
    %564 = vsyncpa [#allocation4], 1

</llo_original>
